<compile_context>
chip_gen: v6e
topology: v6e:2x2x1
jax: 0.10.0
libtpu: 0.0.40
codegen_flags: <defaults>
</compile_context>

<pallas_src>
import jax
import jax.numpy as jnp
from jax.experimental import pallas as pl
from jax.experimental.pallas import tpu as pltpu

LANE = 128      # TPU lane width (last dim)
SUBLANE = 8     # f32 sublane width (second-to-last dim)
OUT_COLS = 8    # narrow (sublane-wide) output block; wrapper keeps column 0


def _round_up(n, m):
    return ((n + m - 1) // m) * m


def _choose_batch_tile(B, batch_tile):
    """8-aligned batch tile; >= 2 grid steps whenever B allows (v7x: 2 TCs)."""
    full = _round_up(B, SUBLANE)
    if full <= SUBLANE:
        return SUBLANE
    bt_req = max(SUBLANE, (int(batch_tile) // SUBLANE) * SUBLANE)
    two_way = _round_up(pl.cdiv(B, 2), SUBLANE)   # split batch across >= 2 steps
    return min(bt_req, two_way, full)


def critic_kernel(s_ref, a_ref,
                  w1s_ref, w1a_ref, b1_ref,
                  w2_ref, b2_ref,
                  w3_ref, b3_ref,
                  w4_ref, b4_ref,
                  w5_ref, b5_ref,
                  out_ref):
    """One batch tile of the Critic forward pass.

    x = cat(state, action); x = l1(x); x = l2(x); x = l3(x)
    x = relu(l4(x)); x = l5(x); x = |x|        (squeeze(1) done by the wrapper)
    """
    # linear1 with the concat fused:  [s, a] @ W1  ==  s @ W1[:sd] + a @ W1[sd:]
    h = (jnp.dot(s_ref[...], w1s_ref[...], preferred_element_type=jnp.float32)
         + jnp.dot(a_ref[...], w1a_ref[...], preferred_element_type=jnp.float32)
         + b1_ref[...])
    h = jnp.dot(h, w2_ref[...], preferred_element_type=jnp.float32) + b2_ref[...]
    h = jnp.dot(h, w3_ref[...], preferred_element_type=jnp.float32) + b3_ref[...]
    h = jnp.dot(h, w4_ref[...], preferred_element_type=jnp.float32) + b4_ref[...]
    h = jnp.maximum(h, 0.0)                                   # F.relu
    y = jnp.dot(h, w5_ref[...], preferred_element_type=jnp.float32) + b5_ref[...]
    out_ref[...] = jnp.abs(y)                                 # torch.abs, narrow store


def prepare_critic_params(params, state_dim):
    """One-time weight prep (split/cast/pad); keep the result and reuse it.

    * W1 is split into its state / action row blocks so torch.cat is fused
      in-kernel (K rows stay at native width).
    * Hidden (output) columns are padded to the 128-lane width.
    * Layer 5 is padded to 8 output columns only (narrow writeback).
    Padded rows/columns are exact zeros, so the math is unchanged.
    """
    f32 = jnp.float32
    w1 = jnp.asarray(params["w1"], f32)
    in_dim, hidden = w1.shape
    action_dim = in_dim - state_dim
    h_p = _round_up(hidden, LANE)

    def pad2(a, rows, cols):
        a = jnp.asarray(a, f32)
        return jnp.pad(a, ((0, rows - a.shape[0]), (0, cols - a.shape[1])))

    return {
        "state_dim": state_dim,
        "action_dim": action_dim,
        "h_p": h_p,
        "w1s": pad2(w1[:state_dim], state_dim, h_p),
        "w1a": pad2(w1[state_dim:], action_dim, h_p),
        "b1": pad2(params["b1"], 1, h_p),
        "w2": pad2(params["w2"], h_p, h_p), "b2": pad2(params["b2"], 1, h_p),
        "w3": pad2(params["w3"], h_p, h_p), "b3": pad2(params["b3"], 1, h_p),
        "w4": pad2(params["w4"], h_p, h_p), "b4": pad2(params["b4"], 1, h_p),
        "w5": pad2(params["w5"], h_p, OUT_COLS), "b5": pad2(params["b5"], 1, OUT_COLS),
    }


def critic_forward(state, action, prepped, *, batch_tile=512):
    """Pallas-backed Critic.forward.  Returns shape (B,) like x.squeeze(1)."""
    B, state_dim = state.shape
    _, action_dim = action.shape
    assert state_dim == prepped["state_dim"], "state_dim mismatch with prepared params"
    assert action_dim == prepped["action_dim"], "action_dim mismatch with prepared params"
    h_p = prepped["h_p"]
    f32 = jnp.float32

    bt = _choose_batch_tile(B, batch_tile)
    grid = (pl.cdiv(B, bt),)

    state = state.astype(f32)
    action = action.astype(f32)

    def w_spec(shape):
        # Grid-invariant block: same (0, 0) block every step -> not re-DMA'd.
        # TODO(synk): for hidden >= ~512 on v7x, add pipeline_mode=pl.Buffered(1)
        # here and re-derive vmem_limit against the 64-MiB per-TC budget.
        return pl.BlockSpec(shape, lambda i: (0, 0))

    in_specs = [
        pl.BlockSpec((bt, state_dim), lambda i: (i, 0)),       # state tile, native width
        pl.BlockSpec((bt, action_dim), lambda i: (i, 0)),      # action tile, native width
        w_spec((state_dim, h_p)), w_spec((action_dim, h_p)), w_spec((1, h_p)),  # linear1
        w_spec((h_p, h_p)), w_spec((1, h_p)),                                   # linear2
        w_spec((h_p, h_p)), w_spec((1, h_p)),                                   # linear3
        w_spec((h_p, h_p)), w_spec((1, h_p)),                                   # linear4
        w_spec((h_p, OUT_COLS)), w_spec((1, OUT_COLS)),                         # linear5
    ]
    out_spec = pl.BlockSpec((bt, OUT_COLS), lambda i: (i, 0))

    # Generous explicit VMEM budget (double-buffered I/O tiles + weights +
    # headroom for intermediates), capped well under v7x's 64-MiB per-TC VMEM.
    weight_bytes = 4 * sum(int(prepped[k].size) for k in
                           ("w1s", "w1a", "b1", "w2", "b2", "w3", "b3",
                            "w4", "b4", "w5", "b5"))
    tile_bytes = 4 * bt * (state_dim + action_dim + h_p + OUT_COLS)
    vmem_limit = int(min(max(4 * tile_bytes + 3 * weight_bytes, 16 << 20), 48 << 20))

    out = pl.pallas_call(
        critic_kernel,
        out_shape=jax.ShapeDtypeStruct((B, OUT_COLS), f32),
        grid_spec=pltpu.PrefetchScalarGridSpec(
            num_scalar_prefetch=0,
            grid=grid,
            in_specs=in_specs,
            out_specs=out_spec,
        ),
        compiler_params=pltpu.CompilerParams(
            dimension_semantics=("parallel",),
            vmem_limit_bytes=vmem_limit,
        ),
    )(state, action,
      prepped["w1s"], prepped["w1a"], prepped["b1"],
      prepped["w2"], prepped["b2"],
      prepped["w3"], prepped["b3"],
      prepped["w4"], prepped["b4"],
      prepped["w5"], prepped["b5"])

    return out[:, 0]                                           # .squeeze(1)


def init_critic_params(key, state_dim, action_dim, hidden_dim, init_w=0.003):
    """Synthetic init mirroring the PyTorch module's shapes.

    linear1..linear4: PyTorch default U(-1/sqrt(fan_in), 1/sqrt(fan_in))
    linear5: U(-init_w, init_w)  (weight and bias)
    Weights stored as (in, out) for direct x @ W matmul in the kernel.
    """
    in_dim = state_dim + action_dim
    dims = [(in_dim, hidden_dim),
            (hidden_dim, hidden_dim),
            (hidden_dim, hidden_dim),
            (hidden_dim, hidden_dim),
            (hidden_dim, 1)]
    params = {}
    keys = jax.random.split(key, 10)
    for idx, (fan_in, fan_out) in enumerate(dims, start=1):
        bound = (1.0 / jnp.sqrt(jnp.float32(fan_in))) if idx < 5 else jnp.float32(init_w)
        wk, bk = keys[2 * (idx - 1)], keys[2 * (idx - 1) + 1]
        params[f"w{idx}"] = jax.random.uniform(
            wk, (fan_in, fan_out), jnp.float32, -bound, bound)
        params[f"b{idx}"] = jax.random.uniform(
            bk, (1, fan_out), jnp.float32, -bound, bound)
    return params


def _reference(state, action, params):
    x = jnp.concatenate([state, action], axis=1)
    h = x @ params["w1"] + params["b1"]
    h = h @ params["w2"] + params["b2"]
    h = h @ params["w3"] + params["b3"]
    h = jnp.maximum(h @ params["w4"] + params["b4"], 0.0)
    return jnp.abs(h @ params["w5"] + params["b5"])[:, 0]


if __name__ == "__main__":
    # Small shapes consistent with the module's forward:
    # state (B, state_dim), action (B, action_dim)
    state_dim, action_dim, hidden_dim = 16, 8, 32

    key = jax.random.PRNGKey(0)
    pkey, skey, akey, skey2, akey2 = jax.random.split(key, 5)
    params = init_critic_params(pkey, state_dim, action_dim, hidden_dim)
    prepped = prepare_critic_params(params, state_dim)     # one-time weight prep

    # --- small batch (single grid step, native-width input blocks) ---
    B = 8
    state = jax.random.normal(skey, (B, state_dim), jnp.float32)
    action = jax.random.normal(akey, (B, action_dim), jnp.float32)
    out = jax.block_until_ready(critic_forward(state, action, prepped))
    ref = _reference(state, action, params)
    assert out.shape == (B,), out.shape
    assert jnp.allclose(out, ref, atol=1e-4, rtol=1e-4)

    # --- non-multiple batch exercising the ragged last tile + >=2 grid steps ---
    B2 = 300
    state2 = jax.random.normal(skey2, (B2, state_dim), jnp.float32)
    action2 = jax.random.normal(akey2, (B2, action_dim), jnp.float32)
    out2 = jax.block_until_ready(critic_forward(state2, action2, prepped))
    ref2 = _reference(state2, action2, params)
    assert out2.shape == (B2,), out2.shape
    assert jnp.allclose(out2, ref2, atol=1e-4, rtol=1e-4)

    print("KERNEL_OK")
</pallas_src>

<mosaic_0001>
module attributes {stable_mosaic.version = 11 : i64} {
  func.func @critic_kernel(%arg0: i32, %arg1: memref<8x16xf32, #tpu.memory_space<vmem>>, %arg2: memref<8x8xf32, #tpu.memory_space<vmem>>, %arg3: memref<16x128xf32, #tpu.memory_space<vmem>>, %arg4: memref<8x128xf32, #tpu.memory_space<vmem>>, %arg5: memref<1x128xf32, #tpu.memory_space<vmem>>, %arg6: memref<128x128xf32, #tpu.memory_space<vmem>>, %arg7: memref<1x128xf32, #tpu.memory_space<vmem>>, %arg8: memref<128x128xf32, #tpu.memory_space<vmem>>, %arg9: memref<1x128xf32, #tpu.memory_space<vmem>>, %arg10: memref<128x128xf32, #tpu.memory_space<vmem>>, %arg11: memref<1x128xf32, #tpu.memory_space<vmem>>, %arg12: memref<128x8xf32, #tpu.memory_space<vmem>>, %arg13: memref<1x8xf32, #tpu.memory_space<vmem>>, %arg14: memref<8x8xf32, #tpu.memory_space<vmem>>) attributes {dimension_semantics = [#tpu.dimension_semantics<parallel>], iteration_bounds = array<i64: 1>, scalar_prefetch = 0 : i64, scratch_operands = 0 : i64, tpu.core_type = #tpu.core_type<tc>, window_params = [{transform_indices = @transform_0, window_bounds = array<i64: 8, 16>}, {transform_indices = @transform_1, window_bounds = array<i64: 8, 8>}, {pipeline_mode = #tpu.pipeline_mode<synchronous>, transform_indices = @transform_2, window_bounds = array<i64: 16, 128>}, {pipeline_mode = #tpu.pipeline_mode<synchronous>, transform_indices = @transform_3, window_bounds = array<i64: 8, 128>}, {pipeline_mode = #tpu.pipeline_mode<synchronous>, transform_indices = @transform_4, window_bounds = array<i64: 1, 128>}, {pipeline_mode = #tpu.pipeline_mode<synchronous>, transform_indices = @transform_5, window_bounds = array<i64: 128, 128>}, {pipeline_mode = #tpu.pipeline_mode<synchronous>, transform_indices = @transform_6, window_bounds = array<i64: 1, 128>}, {pipeline_mode = #tpu.pipeline_mode<synchronous>, transform_indices = @transform_7, window_bounds = array<i64: 128, 128>}, {pipeline_mode = #tpu.pipeline_mode<synchronous>, transform_indices = @transform_8, window_bounds = array<i64: 1, 128>}, {pipeline_mode = #tpu.pipeline_mode<synchronous>, transform_indices = @transform_9, window_bounds = array<i64: 128, 128>}, {pipeline_mode = #tpu.pipeline_mode<synchronous>, transform_indices = @transform_10, window_bounds = array<i64: 1, 128>}, {pipeline_mode = #tpu.pipeline_mode<synchronous>, transform_indices = @transform_11, window_bounds = array<i64: 128, 8>}, {pipeline_mode = #tpu.pipeline_mode<synchronous>, transform_indices = @transform_12, window_bounds = array<i64: 1, 8>}, {transform_indices = @transform_13, window_bounds = array<i64: 8, 8>}]} {
    %c0 = arith.constant 0 : index
    %c0_0 = arith.constant 0 : index
    %0 = vector.load %arg1[%c0, %c0_0] : memref<8x16xf32, #tpu.memory_space<vmem>>, vector<8x16xf32>
    %c0_1 = arith.constant 0 : index
    %c0_2 = arith.constant 0 : index
    %1 = vector.load %arg3[%c0_1, %c0_2] : memref<16x128xf32, #tpu.memory_space<vmem>>, vector<16x128xf32>
    %cst = arith.constant dense<0.000000e+00> : vector<8x128xf32>
    %2 = tpu.matmul %0, %1, %cst {dimension_numbers = #tpu.dot_dimension_numbers<[1], [0], [0], [1], [0, 0, 1, 1], [], []>} : vector<8x16xf32>, vector<16x128xf32>, vector<8x128xf32> -> vector<8x128xf32>
    %c0_3 = arith.constant 0 : index
    %c0_4 = arith.constant 0 : index
    %3 = vector.load %arg2[%c0_3, %c0_4] : memref<8x8xf32, #tpu.memory_space<vmem>>, vector<8x8xf32>
    %c0_5 = arith.constant 0 : index
    %c0_6 = arith.constant 0 : index
    %4 = vector.load %arg4[%c0_5, %c0_6] : memref<8x128xf32, #tpu.memory_space<vmem>>, vector<8x128xf32>
    %cst_7 = arith.constant dense<0.000000e+00> : vector<8x128xf32>
    %5 = tpu.matmul %3, %4, %cst_7 {dimension_numbers = #tpu.dot_dimension_numbers<[1], [0], [0], [1], [0, 0, 1, 1], [], []>} : vector<8x8xf32>, vector<8x128xf32>, vector<8x128xf32> -> vector<8x128xf32>
    %6 = arith.addf %2, %5 : vector<8x128xf32>
    %c0_8 = arith.constant 0 : index
    %c0_9 = arith.constant 0 : index
    %7 = vector.load %arg5[%c0_8, %c0_9] : memref<1x128xf32, #tpu.memory_space<vmem>>, vector<1x128xf32>
    %8 = vector.broadcast %7 : vector<1x128xf32> to vector<8x128xf32>
    %9 = arith.addf %6, %8 : vector<8x128xf32>
    %c0_10 = arith.constant 0 : index
    %c0_11 = arith.constant 0 : index
    %10 = vector.load %arg6[%c0_10, %c0_11] : memref<128x128xf32, #tpu.memory_space<vmem>>, vector<128x128xf32>
    %cst_12 = arith.constant dense<0.000000e+00> : vector<8x128xf32>
    %11 = tpu.matmul %9, %10, %cst_12 {dimension_numbers = #tpu.dot_dimension_numbers<[1], [0], [0], [1], [0, 0, 1, 1], [], []>} : vector<8x128xf32>, vector<128x128xf32>, vector<8x128xf32> -> vector<8x128xf32>
    %c0_13 = arith.constant 0 : index
    %c0_14 = arith.constant 0 : index
    %12 = vector.load %arg7[%c0_13, %c0_14] : memref<1x128xf32, #tpu.memory_space<vmem>>, vector<1x128xf32>
    %13 = vector.broadcast %12 : vector<1x128xf32> to vector<8x128xf32>
    %14 = arith.addf %11, %13 : vector<8x128xf32>
    %c0_15 = arith.constant 0 : index
    %c0_16 = arith.constant 0 : index
    %15 = vector.load %arg8[%c0_15, %c0_16] : memref<128x128xf32, #tpu.memory_space<vmem>>, vector<128x128xf32>
    %cst_17 = arith.constant dense<0.000000e+00> : vector<8x128xf32>
    %16 = tpu.matmul %14, %15, %cst_17 {dimension_numbers = #tpu.dot_dimension_numbers<[1], [0], [0], [1], [0, 0, 1, 1], [], []>} : vector<8x128xf32>, vector<128x128xf32>, vector<8x128xf32> -> vector<8x128xf32>
    %c0_18 = arith.constant 0 : index
    %c0_19 = arith.constant 0 : index
    %17 = vector.load %arg9[%c0_18, %c0_19] : memref<1x128xf32, #tpu.memory_space<vmem>>, vector<1x128xf32>
    %18 = vector.broadcast %17 : vector<1x128xf32> to vector<8x128xf32>
    %19 = arith.addf %16, %18 : vector<8x128xf32>
    %c0_20 = arith.constant 0 : index
    %c0_21 = arith.constant 0 : index
    %20 = vector.load %arg10[%c0_20, %c0_21] : memref<128x128xf32, #tpu.memory_space<vmem>>, vector<128x128xf32>
    %cst_22 = arith.constant dense<0.000000e+00> : vector<8x128xf32>
    %21 = tpu.matmul %19, %20, %cst_22 {dimension_numbers = #tpu.dot_dimension_numbers<[1], [0], [0], [1], [0, 0, 1, 1], [], []>} : vector<8x128xf32>, vector<128x128xf32>, vector<8x128xf32> -> vector<8x128xf32>
    %c0_23 = arith.constant 0 : index
    %c0_24 = arith.constant 0 : index
    %22 = vector.load %arg11[%c0_23, %c0_24] : memref<1x128xf32, #tpu.memory_space<vmem>>, vector<1x128xf32>
    %23 = vector.broadcast %22 : vector<1x128xf32> to vector<8x128xf32>
    %24 = arith.addf %21, %23 : vector<8x128xf32>
    %cst_25 = arith.constant 0.000000e+00 : f32
    %25 = vector.broadcast %cst_25 : f32 to vector<8x128xf32>
    %26 = arith.maximumf %24, %25 : vector<8x128xf32>
    %c0_26 = arith.constant 0 : index
    %c0_27 = arith.constant 0 : index
    %27 = vector.load %arg12[%c0_26, %c0_27] : memref<128x8xf32, #tpu.memory_space<vmem>>, vector<128x8xf32>
    %cst_28 = arith.constant dense<0.000000e+00> : vector<8x8xf32>
    %28 = tpu.matmul %26, %27, %cst_28 {dimension_numbers = #tpu.dot_dimension_numbers<[1], [0], [0], [1], [0, 0, 1, 1], [], []>} : vector<8x128xf32>, vector<128x8xf32>, vector<8x8xf32> -> vector<8x8xf32>
    %c0_29 = arith.constant 0 : index
    %c0_30 = arith.constant 0 : index
    %29 = vector.load %arg13[%c0_29, %c0_30] : memref<1x8xf32, #tpu.memory_space<vmem>>, vector<1x8xf32>
    %30 = vector.broadcast %29 : vector<1x8xf32> to vector<8x8xf32>
    %31 = arith.addf %28, %30 : vector<8x8xf32>
    %32 = math.absf %31 : vector<8x8xf32>
    %c0_31 = arith.constant 0 : index
    %c0_32 = arith.constant 0 : index
    %33 = vector.load %arg14[%c0_31, %c0_32] : memref<8x8xf32, #tpu.memory_space<vmem>>, vector<8x8xf32>
    tpu.vector_store %arg14[%c0_31, %c0_32], %32 {strides = array<i32>} : memref<8x8xf32, #tpu.memory_space<vmem>>, vector<8x8xf32>,
    return
  }
  func.func @transform_0(%arg0: i32) -> (i32, i32) {
    %c0_i32 = arith.constant 0 : i32
    %c0_i32_0 = arith.constant 0 : i32
    return %arg0, %c0_i32 : i32, i32
  }
  func.func @transform_1(%arg0: i32) -> (i32, i32) {
    %c0_i32 = arith.constant 0 : i32
    %c0_i32_0 = arith.constant 0 : i32
    return %arg0, %c0_i32 : i32, i32
  }
  func.func @transform_2(%arg0: i32) -> (i32, i32) {
    %c0_i32 = arith.constant 0 : i32
    %c0_i32_0 = arith.constant 0 : i32
    %c0_i32_1 = arith.constant 0 : i32
    return %c0_i32, %c0_i32_0 : i32, i32
  }
  func.func @transform_3(%arg0: i32) -> (i32, i32) {
    %c0_i32 = arith.constant 0 : i32
    %c0_i32_0 = arith.constant 0 : i32
    %c0_i32_1 = arith.constant 0 : i32
    return %c0_i32, %c0_i32_0 : i32, i32
  }
  func.func @transform_4(%arg0: i32) -> (i32, i32) {
    %c0_i32 = arith.constant 0 : i32
    %c0_i32_0 = arith.constant 0 : i32
    %c0_i32_1 = arith.constant 0 : i32
    return %c0_i32, %c0_i32_0 : i32, i32
  }
  func.func @transform_5(%arg0: i32) -> (i32, i32) {
    %c0_i32 = arith.constant 0 : i32
    %c0_i32_0 = arith.constant 0 : i32
    %c0_i32_1 = arith.constant 0 : i32
    return %c0_i32, %c0_i32_0 : i32, i32
  }
  func.func @transform_6(%arg0: i32) -> (i32, i32) {
    %c0_i32 = arith.constant 0 : i32
    %c0_i32_0 = arith.constant 0 : i32
    %c0_i32_1 = arith.constant 0 : i32
    return %c0_i32, %c0_i32_0 : i32, i32
  }
  func.func @transform_7(%arg0: i32) -> (i32, i32) {
    %c0_i32 = arith.constant 0 : i32
    %c0_i32_0 = arith.constant 0 : i32
    %c0_i32_1 = arith.constant 0 : i32
    return %c0_i32, %c0_i32_0 : i32, i32
  }
  func.func @transform_8(%arg0: i32) -> (i32, i32) {
    %c0_i32 = arith.constant 0 : i32
    %c0_i32_0 = arith.constant 0 : i32
    %c0_i32_1 = arith.constant 0 : i32
    return %c0_i32, %c0_i32_0 : i32, i32
  }
  func.func @transform_9(%arg0: i32) -> (i32, i32) {
    %c0_i32 = arith.constant 0 : i32
    %c0_i32_0 = arith.constant 0 : i32
    %c0_i32_1 = arith.constant 0 : i32
    return %c0_i32, %c0_i32_0 : i32, i32
  }
  func.func @transform_10(%arg0: i32) -> (i32, i32) {
    %c0_i32 = arith.constant 0 : i32
    %c0_i32_0 = arith.constant 0 : i32
    %c0_i32_1 = arith.constant 0 : i32
    return %c0_i32, %c0_i32_0 : i32, i32
  }
  func.func @transform_11(%arg0: i32) -> (i32, i32) {
    %c0_i32 = arith.constant 0 : i32
    %c0_i32_0 = arith.constant 0 : i32
    %c0_i32_1 = arith.constant 0 : i32
    return %c0_i32, %c0_i32_0 : i32, i32
  }
  func.func @transform_12(%arg0: i32) -> (i32, i32) {
    %c0_i32 = arith.constant 0 : i32
    %c0_i32_0 = arith.constant 0 : i32
    %c0_i32_1 = arith.constant 0 : i32
    return %c0_i32, %c0_i32_0 : i32, i32
  }
  func.func @transform_13(%arg0: i32) -> (i32, i32) {
    %c0_i32 = arith.constant 0 : i32
    %c0_i32_0 = arith.constant 0 : i32
    return %arg0, %c0_i32 : i32, i32
  }
}

</mosaic_0001>

<llo_original>
// kernel: tpu_custom_call.1
$region0: #{tpu_custom_call.1}
  #allocation0 [shape = 'u32[]', space=smem, size = 0x4, offset = 0x4, fixed_abs, tag = 'smem constant byte address 0x4 - core index']
  #allocation1 [shape = 'u32[144,128]{1,0:T(1,128)}', space=vmem, size = 0x12000, scoped, tag = 'internal scratch']
  %s0 = inlined_call_operand.hbm [shape: f32[8,16], index: 0, kind: input, shape index: {}]
  %s1 = inlined_call_operand.hbm [shape: f32[8,8], index: 1, kind: input, shape index: {}]
  %s2 = inlined_call_operand.vmem [shape: f32[16,128], index: 2, kind: input, shape index: {}]
  %s3 = inlined_call_operand.hbm [shape: f32[8,128], index: 3, kind: input, shape index: {}]
  %s4 = inlined_call_operand.hbm [shape: f32[1,128], index: 4, kind: input, shape index: {}]
  %s5 = inlined_call_operand.vmem [shape: f32[128,128], index: 5, kind: input, shape index: {}]
  %s6 = inlined_call_operand.hbm [shape: f32[1,128], index: 6, kind: input, shape index: {}]
  %s7 = inlined_call_operand.hbm [shape: f32[128,128], index: 7, kind: input, shape index: {}]
  %s8 = inlined_call_operand.hbm [shape: f32[1,128], index: 8, kind: input, shape index: {}]
  %s9 = inlined_call_operand.hbm [shape: f32[128,128], index: 9, kind: input, shape index: {}]
  %s10 = inlined_call_operand.vmem [shape: f32[1,128], index: 10, kind: input, shape index: {}]
  %s11 = inlined_call_operand.vmem [shape: f32[128,8], index: 11, kind: input, shape index: {}]
  %s12 = inlined_call_operand.vmem [shape: f32[1,8], index: 12, kind: input, shape index: {}]
  %s13 = inlined_call_operand.hbm [shape: f32[8,8], index: 13, kind: output, shape index: {}]
  %s14 = sld [smem:[#allocation0]]
  $region94: #{tpu_custom_call.1} parent=0
    _
  %s16 = ssub.s32 1, %s14
  %s17 = scalar_select 0, %s16, %s14
  $region1: #{tpu_custom_call.1} parent=0
    #allocation2 [shape = 'u8[4096]{0}', space=vmem, size = 0x1000, scoped, tag = 'input window, operand 0, single buffered']
    #allocation3 [shape = 's32[1]{0}', space=sflag, size = 0x4, scoped, tag = 'scoped memory for tpu_custom_call.1']
    #allocation4 [shape = 's32[1]{0}', space=sflag, size = 0x4, scoped, tag = 'scoped memory for tpu_custom_call.1']
    #allocation5 [shape = 'u8[4096]{0}', space=vmem, size = 0x1000, scoped, tag = 'input window, operand 1, single buffered']
    #allocation6 [shape = 's32[1]{0}', space=sflag, size = 0x4, scoped, tag = 'scoped memory for tpu_custom_call.1']
    #allocation7 [shape = 'u8[4096]{0}', space=vmem, size = 0x1000, scoped, tag = 'input window, operand 3, single buffered']
    #allocation8 [shape = 'u8[512]{0}', space=vmem, size = 0x400, scoped, tag = 'input window, operand 4, single buffered']
    #allocation9 [shape = 's32[1]{0}', space=sflag, size = 0x4, scoped, tag = 'scoped memory for tpu_custom_call.1']
    #allocation10 [shape = 'u8[512]{0}', space=vmem, size = 0x400, scoped, tag = 'input window, operand 6, single buffered']
    #allocation11 [shape = 'u8[65536]{0}', space=vmem, size = 0x10000, scoped, tag = 'input window, operand 7, single buffered']
    #allocation12 [shape = 's32[1]{0}', space=sflag, size = 0x4, scoped, tag = 'scoped memory for tpu_custom_call.1']
    #allocation13 [shape = 'u8[512]{0}', space=vmem, size = 0x400, scoped, tag = 'input window, operand 8, single buffered']
    #allocation14 [shape = 'u8[65536]{0}', space=vmem, size = 0x10000, scoped, tag = 'input window, operand 9, single buffered']
    #allocation15 [shape = 's32[1]{0}', space=sflag, size = 0x4, scoped, tag = 'scoped memory for tpu_custom_call.1']
    #allocation16 [shape = 'u8[4096]{0}', space=vmem, size = 0x1000, scoped, tag = 'output window, operand 0, single buffered']
    %18 = vsyncpa [#allocation3], 0
    %19 = vsyncpa [#allocation6], 0
    %20 = vsyncpa [#allocation9], 0
    %21 = vsyncpa [#allocation12], 0
    %22 = vsyncpa [#allocation15], 0
    %23 = vsyncpa [#allocation4], 0
    // Predicated region
    $region2: #{tpu_custom_call.1} parent=1 // pred_check
      _
    $region3: #{tpu_custom_call.1} parent=1 // pred_check_branch
      %25 = sbr.rel (0) target = $region5
    $region4: #{tpu_custom_call.1} parent=1 // pred_region
      %s27 = ssub.s32 128, 128
      %28 = vsyncadd [#allocation3], %s27
      %s30 = sshll.u32 [#allocation2], 4
      %s31 = int_to_ptr.vmem [resolvable:$true] %s30
      %33 = dma.hbm_to_vmem [thread:$0]  %s0, 128, %s31, [#allocation3]
    $region5: #{tpu_custom_call.1} parent=1 // pred_fallthru
      _
    // Predicated region
    $region6: #{tpu_custom_call.1} parent=1 // pred_check
      _
    $region7: #{tpu_custom_call.1} parent=1 // pred_check_branch
      %35 = sbr.rel (0) target = $region9
    $region8: #{tpu_custom_call.1} parent=1 // pred_region
      %s37 = ssub.s32 128, 128
      %38 = vsyncadd [#allocation6], %s37
      %s40 = sshll.u32 [#allocation5], 4
      %s41 = int_to_ptr.vmem [resolvable:$true] %s40
      %43 = dma.hbm_to_vmem [thread:$0]  %s1, 128, %s41, [#allocation6]
    $region9: #{tpu_custom_call.1} parent=1 // pred_fallthru
      _
    // Predicated region
    $region10: #{tpu_custom_call.1} parent=1 // pred_check
      _
    $region11: #{tpu_custom_call.1} parent=1 // pred_check_branch
      %45 = sbr.rel (0) target = $region13
    $region12: #{tpu_custom_call.1} parent=1 // pred_region
      _
    $region13: #{tpu_custom_call.1} parent=1 // pred_fallthru
      _
    // Predicated region
    $region14: #{tpu_custom_call.1} parent=1 // pred_check
      _
    $region15: #{tpu_custom_call.1} parent=1 // pred_check_branch
      %47 = sbr.rel (0) target = $region17
    $region16: #{tpu_custom_call.1} parent=1 // pred_region
      %s49 = ssub.s32 128, 128
      %50 = vsyncadd [#allocation6], %s49
      %s52 = sshll.u32 [#allocation7], 4
      %s53 = int_to_ptr.vmem [resolvable:$true] %s52
      %55 = dma.hbm_to_vmem [thread:$0]  %s3, 128, %s53, [#allocation6]
    $region17: #{tpu_custom_call.1} parent=1 // pred_fallthru
      _
    // Predicated region
    $region18: #{tpu_custom_call.1} parent=1 // pred_check
      _
    $region19: #{tpu_custom_call.1} parent=1 // pred_check_branch
      %57 = sbr.rel (0) target = $region21
    $region20: #{tpu_custom_call.1} parent=1 // pred_region
      %s59 = ssub.s32 16, 16
      %60 = vsyncadd [#allocation9], %s59
      %s62 = sshll.u32 [#allocation8], 4
      %s63 = int_to_ptr.vmem [resolvable:$true] %s62
      %65 = dma.hbm_to_vmem [thread:$0]  %s4, 16, %s63, [#allocation9]
    $region21: #{tpu_custom_call.1} parent=1 // pred_fallthru
      _
    // Predicated region
    $region22: #{tpu_custom_call.1} parent=1 // pred_check
      _
    $region23: #{tpu_custom_call.1} parent=1 // pred_check_branch
      %67 = sbr.rel (0) target = $region25
    $region24: #{tpu_custom_call.1} parent=1 // pred_region
      _
    $region25: #{tpu_custom_call.1} parent=1 // pred_fallthru
      _
    // Predicated region
    $region26: #{tpu_custom_call.1} parent=1 // pred_check
      _
    $region27: #{tpu_custom_call.1} parent=1 // pred_check_branch
      %69 = sbr.rel (0) target = $region29
    $region28: #{tpu_custom_call.1} parent=1 // pred_region
      %s71 = ssub.s32 16, 16
      %72 = vsyncadd [#allocation9], %s71
      %s74 = sshll.u32 [#allocation10], 4
      %s75 = int_to_ptr.vmem [resolvable:$true] %s74
      %77 = dma.hbm_to_vmem [thread:$0]  %s6, 16, %s75, [#allocation9]
    $region29: #{tpu_custom_call.1} parent=1 // pred_fallthru
      _
    // Predicated region
    $region30: #{tpu_custom_call.1} parent=1 // pred_check
      _
    $region31: #{tpu_custom_call.1} parent=1 // pred_check_branch
      %79 = sbr.rel (0) target = $region33
    $region32: #{tpu_custom_call.1} parent=1 // pred_region
      %s81 = ssub.s32 2048, 2048
      %82 = vsyncadd [#allocation12], %s81
      %s83 = sshll.u32 [#allocation11], 4
      %s84 = int_to_ptr.vmem [resolvable:$true] %s83
      %89 = dma.hbm_to_vmem [thread:$0]  %s7, 2048, %s84, [#allocation12], 128, 128, 8
    $region33: #{tpu_custom_call.1} parent=1 // pred_fallthru
      _
    // Predicated region
    $region34: #{tpu_custom_call.1} parent=1 // pred_check
      _
    $region35: #{tpu_custom_call.1} parent=1 // pred_check_branch
      %91 = sbr.rel (0) target = $region37
    $region36: #{tpu_custom_call.1} parent=1 // pred_region
      %s93 = ssub.s32 16, 16
      %94 = vsyncadd [#allocation12], %s93
      %s96 = sshll.u32 [#allocation13], 4
      %s97 = int_to_ptr.vmem [resolvable:$true] %s96
      %99 = dma.hbm_to_vmem [thread:$0]  %s8, 16, %s97, [#allocation12]
    $region37: #{tpu_custom_call.1} parent=1 // pred_fallthru
      _
    // Predicated region
    $region38: #{tpu_custom_call.1} parent=1 // pred_check
      _
    $region39: #{tpu_custom_call.1} parent=1 // pred_check_branch
      %101 = sbr.rel (0) target = $region41
    $region40: #{tpu_custom_call.1} parent=1 // pred_region
      %s103 = ssub.s32 2048, 2048
      %104 = vsyncadd [#allocation15], %s103
      %s105 = sshll.u32 [#allocation14], 4
      %s106 = int_to_ptr.vmem [resolvable:$true] %s105
      %111 = dma.hbm_to_vmem [thread:$0]  %s9, 2048, %s106, [#allocation15], 128, 128, 8
    $region41: #{tpu_custom_call.1} parent=1 // pred_fallthru
      _
    // Predicated region
    $region42: #{tpu_custom_call.1} parent=1 // pred_check
      _
    $region43: #{tpu_custom_call.1} parent=1 // pred_check_branch
      %113 = sbr.rel (0) target = $region45
    $region44: #{tpu_custom_call.1} parent=1 // pred_region
      _
    $region45: #{tpu_custom_call.1} parent=1 // pred_fallthru
      _
    // Predicated region
    $region46: #{tpu_custom_call.1} parent=1 // pred_check
      _
    $region47: #{tpu_custom_call.1} parent=1 // pred_check_branch
      %115 = sbr.rel (0) target = $region49
    $region48: #{tpu_custom_call.1} parent=1 // pred_region
      _
    $region49: #{tpu_custom_call.1} parent=1 // pred_fallthru
      _
    // Predicated region
    $region50: #{tpu_custom_call.1} parent=1 // pred_check
      _
    $region51: #{tpu_custom_call.1} parent=1 // pred_check_branch
      %117 = sbr.rel (0) target = $region53
    $region52: #{tpu_custom_call.1} parent=1 // pred_region
      _
    $region53: #{tpu_custom_call.1} parent=1 // pred_fallthru
      _
    // Predicated region
    $region54: #{tpu_custom_call.1} parent=1 // pred_check
      _
    $region55: #{tpu_custom_call.1} parent=1 // pred_check_branch
      %119 = sbr.rel (0) target = $region57
    $region56: #{tpu_custom_call.1} parent=1 // pred_region
      %120 = dma.done [#allocation3], 128
    $region57: #{tpu_custom_call.1} parent=1 // pred_fallthru
      _
    // Predicated region
    $region58: #{tpu_custom_call.1} parent=1 // pred_check
      _
    $region59: #{tpu_custom_call.1} parent=1 // pred_check_branch
      %122 = sbr.rel (0) target = $region61
    $region60: #{tpu_custom_call.1} parent=1 // pred_region
      %123 = dma.done [#allocation6], 128
    $region61: #{tpu_custom_call.1} parent=1 // pred_fallthru
      _
    // Predicated region
    $region62: #{tpu_custom_call.1} parent=1 // pred_check
      _
    $region63: #{tpu_custom_call.1} parent=1 // pred_check_branch
      %125 = sbr.rel (0) target = $region65
    $region64: #{tpu_custom_call.1} parent=1 // pred_region
      %126 = dma.done [#allocation6], 128
    $region65: #{tpu_custom_call.1} parent=1 // pred_fallthru
      _
    // Predicated region
    $region66: #{tpu_custom_call.1} parent=1 // pred_check
      _
    $region67: #{tpu_custom_call.1} parent=1 // pred_check_branch
      %128 = sbr.rel (0) target = $region69
    $region68: #{tpu_custom_call.1} parent=1 // pred_region
      %129 = dma.done [#allocation9], 16
    $region69: #{tpu_custom_call.1} parent=1 // pred_fallthru
      _
    // Predicated region
    $region70: #{tpu_custom_call.1} parent=1 // pred_check
      _
    $region71: #{tpu_custom_call.1} parent=1 // pred_check_branch
      %131 = sbr.rel (0) target = $region73
    $region72: #{tpu_custom_call.1} parent=1 // pred_region
      %132 = dma.done [#allocation9], 16
    $region73: #{tpu_custom_call.1} parent=1 // pred_fallthru
      _
    // Predicated region
    $region74: #{tpu_custom_call.1} parent=1 // pred_check
      _
    $region75: #{tpu_custom_call.1} parent=1 // pred_check_branch
      %134 = sbr.rel (0) target = $region77
    $region76: #{tpu_custom_call.1} parent=1 // pred_region
      %135 = dma.done [#allocation12], 2048
    $region77: #{tpu_custom_call.1} parent=1 // pred_fallthru
      _
    // Predicated region
    $region78: #{tpu_custom_call.1} parent=1 // pred_check
      _
    $region79: #{tpu_custom_call.1} parent=1 // pred_check_branch
      %137 = sbr.rel (0) target = $region81
    $region80: #{tpu_custom_call.1} parent=1 // pred_region
      %138 = dma.done [#allocation12], 16
    $region81: #{tpu_custom_call.1} parent=1 // pred_fallthru
      _
    // Predicated region
    $region82: #{tpu_custom_call.1} parent=1 // pred_check
      _
    $region83: #{tpu_custom_call.1} parent=1 // pred_check_branch
      %140 = sbr.rel (0) target = $region85
    $region84: #{tpu_custom_call.1} parent=1 // pred_region
      %141 = dma.done [#allocation15], 2048
    $region85: #{tpu_custom_call.1} parent=1 // pred_fallthru
      _
    %v142 = vld [vmem:[#allocation2] sm:$0xff]
    %v143 = vld [vmem:[%s2] sm:$0xff]
    %v144 = vld [vmem:[%s2 + $0x8] sm:$0xff]
    %v145 = vld [vmem:[#allocation5] sm:$0xff]
    %v146 = vld [vmem:[#allocation7] sm:$0xff]
    %vm147 = vcmask 64512
    %v149 = vsel %vm147, %v145, 0
    %151 = vmatprep.subr.mxu0 0.0
    %152 = vmatpush1.msra.mxu0 0.0
    %153 = vmatprep.subr.mxu0 0.0
    %154 = vmatpush1.msra.mxu0 0.0
    %155 = vmatprep.subr.mxu0 0.0
    %156 = vmatpush1.msra.mxu0 0.0
    %157 = vmatprep.subr.mxu0 0.0
    %158 = vmatpush1.msra.mxu0 0.0
    %159 = vmatprep.subr.mxu0 0.0
    %160 = vmatpush1.msra.mxu0 0.0
    %161 = vmatprep.subr.mxu0 0.0
    %162 = vmatpush1.msra.mxu0 0.0
    %163 = vmatprep.subr.mxu0 0.0
    %164 = vmatpush1.msra.mxu0 0.0
    %165 = vmatprep.subr.mxu0 0.0
    %166 = vmatpush1.msra.mxu0 0.0
    %167 = vmatprep.subr.mxu0 0.0
    %168 = vmatpush1.msra.mxu0 0.0
    %169 = vmatprep.subr.mxu0 0.0
    %170 = vmatpush1.msra.mxu0 0.0
    %171 = vmatprep.subr.mxu0 0.0
    %172 = vmatpush1.msra.mxu0 0.0
    %173 = vmatprep.subr.mxu0 0.0
    %174 = vmatpush1.msra.mxu0 0.0
    %175 = vmatprep.subr.mxu0 0.0
    %176 = vmatpush1.msra.mxu0 0.0
    %177 = vmatprep.subr.mxu0 0.0
    %178 = vmatpush1.msra.mxu0 0.0
    %179 = vmatprep.subr.mxu0 0.0
    %180 = vmatpush1.msra.mxu0 0.0
    %181 = vmatprep.subr.mxu0 0.0
    %182 = vmatpush1.msra.mxu0 %v146
    %183 = vmatprep.subr.mxu0 0.0
    %184 = vmatpush2.msra.mxu0 0.0
    %185 = vmatprep.subr.mxu0 0.0
    %186 = vmatpush2.msra.mxu0 0.0
    %187 = vmatprep.subr.mxu0 0.0
    %188 = vmatpush2.msra.mxu0 0.0
    %189 = vmatprep.subr.mxu0 0.0
    %190 = vmatpush2.msra.mxu0 0.0
    %191 = vmatprep.subr.mxu0 0.0
    %192 = vmatpush2.msra.mxu0 0.0
    %193 = vmatprep.subr.mxu0 0.0
    %194 = vmatpush2.msra.mxu0 0.0
    %195 = vmatprep.subr.mxu0 0.0
    %196 = vmatpush2.msra.mxu0 0.0
    %197 = vmatprep.subr.mxu0 0.0
    %198 = vmatpush2.msra.mxu0 0.0
    %199 = vmatprep.subr.mxu0 0.0
    %200 = vmatpush2.msra.mxu0 0.0
    %201 = vmatprep.subr.mxu0 0.0
    %202 = vmatpush2.msra.mxu0 0.0
    %203 = vmatprep.subr.mxu0 0.0
    %204 = vmatpush2.msra.mxu0 0.0
    %205 = vmatprep.subr.mxu0 0.0
    %206 = vmatpush2.msra.mxu0 0.0
    %207 = vmatprep.subr.mxu0 0.0
    %208 = vmatpush2.msra.mxu0 0.0
    %209 = vmatprep.subr.mxu0 0.0
    %210 = vmatpush2.msra.mxu0 0.0
    %211 = vmatprep.subr.mxu0 0.0
    %212 = vmatpush2.msra.mxu0 0.0
    %213 = vmatprep.subr.mxu0 0.0
    %214 = vmatpush2.msra.mxu0 0.0
    %215 = vmatprep.mubr.f32.mxu0 0.0
    %216 = vmatmul.mubr.f32.gmra.mxu0 %v149
    %v217 = vpop.f32.mrf.mxu0
    %v218 = vadd.f32 0.0, %v217
    %v219 = vpop.f32.mrf.mxu0
    %220 = vdwg.mxu0
    %vm221 = vcmask 130048
    %v223 = vsel %vm221, %v142, 0
    %225 = vmatprep.subr.mxu0 0.0
    %226 = vmatpush1.msra.mxu0 0.0
    %227 = vmatprep.subr.mxu0 0.0
    %228 = vmatpush1.msra.mxu0 0.0
    %229 = vmatprep.subr.mxu0 0.0
    %230 = vmatpush1.msra.mxu0 0.0
    %231 = vmatprep.subr.mxu0 0.0
    %232 = vmatpush1.msra.mxu0 0.0
    %233 = vmatprep.subr.mxu0 0.0
    %234 = vmatpush1.msra.mxu0 0.0
    %235 = vmatprep.subr.mxu0 0.0
    %236 = vmatpush1.msra.mxu0 0.0
    %237 = vmatprep.subr.mxu0 0.0
    %238 = vmatpush1.msra.mxu0 0.0
    %239 = vmatprep.subr.mxu0 0.0
    %240 = vmatpush1.msra.mxu0 0.0
    %241 = vmatprep.subr.mxu0 0.0
    %242 = vmatpush1.msra.mxu0 0.0
    %243 = vmatprep.subr.mxu0 0.0
    %244 = vmatpush1.msra.mxu0 0.0
    %245 = vmatprep.subr.mxu0 0.0
    %246 = vmatpush1.msra.mxu0 0.0
    %247 = vmatprep.subr.mxu0 0.0
    %248 = vmatpush1.msra.mxu0 0.0
    %249 = vmatprep.subr.mxu0 0.0
    %250 = vmatpush1.msra.mxu0 0.0
    %251 = vmatprep.subr.mxu0 0.0
    %252 = vmatpush1.msra.mxu0 0.0
    %253 = vmatprep.subr.mxu0 0.0
    %254 = vmatpush1.msra.mxu0 %v144
    %255 = vmatprep.subr.mxu0 0.0
    %256 = vmatpush1.msra.mxu0 %v143
    %257 = vmatprep.subr.mxu0 0.0
    %258 = vmatpush2.msra.mxu0 0.0
    %259 = vmatprep.subr.mxu0 0.0
    %260 = vmatpush2.msra.mxu0 0.0
    %261 = vmatprep.subr.mxu0 0.0
    %262 = vmatpush2.msra.mxu0 0.0
    %263 = vmatprep.subr.mxu0 0.0
    %264 = vmatpush2.msra.mxu0 0.0
    %265 = vmatprep.subr.mxu0 0.0
    %266 = vmatpush2.msra.mxu0 0.0
    %267 = vmatprep.subr.mxu0 0.0
    %268 = vmatpush2.msra.mxu0 0.0
    %269 = vmatprep.subr.mxu0 0.0
    %270 = vmatpush2.msra.mxu0 0.0
    %271 = vmatprep.subr.mxu0 0.0
    %272 = vmatpush2.msra.mxu0 0.0
    %273 = vmatprep.subr.mxu0 0.0
    %274 = vmatpush2.msra.mxu0 0.0
    %275 = vmatprep.subr.mxu0 0.0
    %276 = vmatpush2.msra.mxu0 0.0
    %277 = vmatprep.subr.mxu0 0.0
    %278 = vmatpush2.msra.mxu0 0.0
    %279 = vmatprep.subr.mxu0 0.0
    %280 = vmatpush2.msra.mxu0 0.0
    %281 = vmatprep.subr.mxu0 0.0
    %282 = vmatpush2.msra.mxu0 0.0
    %283 = vmatprep.subr.mxu0 0.0
    %284 = vmatpush2.msra.mxu0 0.0
    %285 = vmatprep.subr.mxu0 0.0
    %286 = vmatpush2.msra.mxu0 0.0
    %287 = vmatprep.subr.mxu0 0.0
    %288 = vmatpush2.msra.mxu0 0.0
    %289 = vmatprep.mubr.f32.mxu0 0.0
    %290 = vmatmul.mubr.f32.gmra.mxu0 %v223
    %v291 = vpop.f32.mrf.mxu0
    %v292 = vadd.f32 %v218, %v291
    %v293 = vpop.f32.mrf.mxu0
    %294 = vdwg.mxu0
    %v295 = vld [vmem:[#allocation8] sm:$0x1]
    %v297 = vlaneseq
    %v298 = vshrl.u32 %v297, 7
    %v299 = vsub.s32 0, %v298
    %v300 = vrot.slane %v295, %v299
    %v302 = vadd.f32 %v292, %v300
    %v303 = vld [vmem:[%s5] sm:$0xff]
    %v304 = vld [vmem:[%s5 + $0x8] sm:$0xff]
    %v305 = vld [vmem:[%s5 + $0x10] sm:$0xff]
    %v306 = vld [vmem:[%s5 + $0x18] sm:$0xff]
    %v307 = vld [vmem:[%s5 + $0x20] sm:$0xff]
    %v308 = vld [vmem:[%s5 + $0x28] sm:$0xff]
    %v309 = vld [vmem:[%s5 + $0x30] sm:$0xff]
    %v310 = vld [vmem:[%s5 + $0x38] sm:$0xff]
    %v311 = vld [vmem:[%s5 + $0x40] sm:$0xff]
    %v312 = vld [vmem:[%s5 + $0x48] sm:$0xff]
    %v313 = vld [vmem:[%s5 + $0x50] sm:$0xff]
    %v314 = vld [vmem:[%s5 + $0x58] sm:$0xff]
    %v315 = vld [vmem:[%s5 + $0x60] sm:$0xff]
    %v316 = vld [vmem:[%s5 + $0x68] sm:$0xff]
    %v317 = vld [vmem:[%s5 + $0x70] sm:$0xff]
    %v318 = vld [vmem:[%s5 + $0x78] sm:$0xff]
    %v319 = vld [vmem:[#allocation10] sm:$0x1]
    %v321 = vlaneseq
    %v322 = vshrl.u32 %v321, 7
    %v323 = vsub.s32 0, %v322
    %v324 = vrot.slane %v319, %v323
    %326 = vmatprep.subr.mxu0 0.0
    %327 = vmatpush1.msra.mxu0 %v318
    %328 = vmatprep.subr.mxu0 0.0
    %329 = vmatpush1.msra.mxu0 %v317
    %330 = vmatprep.subr.mxu0 0.0
    %331 = vmatpush1.msra.mxu0 %v316
    %332 = vmatprep.subr.mxu0 0.0
    %333 = vmatpush1.msra.mxu0 %v315
    %334 = vmatprep.subr.mxu0 0.0
    %335 = vmatpush1.msra.mxu0 %v314
    %336 = vmatprep.subr.mxu0 0.0
    %337 = vmatpush1.msra.mxu0 %v313
    %338 = vmatprep.subr.mxu0 0.0
    %339 = vmatpush1.msra.mxu0 %v312
    %340 = vmatprep.subr.mxu0 0.0
    %341 = vmatpush1.msra.mxu0 %v311
    %342 = vmatprep.subr.mxu0 0.0
    %343 = vmatpush1.msra.mxu0 %v310
    %344 = vmatprep.subr.mxu0 0.0
    %345 = vmatpush1.msra.mxu0 %v309
    %346 = vmatprep.subr.mxu0 0.0
    %347 = vmatpush1.msra.mxu0 %v308
    %348 = vmatprep.subr.mxu0 0.0
    %349 = vmatpush1.msra.mxu0 %v307
    %350 = vmatprep.subr.mxu0 0.0
    %351 = vmatpush1.msra.mxu0 %v306
    %352 = vmatprep.subr.mxu0 0.0
    %353 = vmatpush1.msra.mxu0 %v305
    %354 = vmatprep.subr.mxu0 0.0
    %355 = vmatpush1.msra.mxu0 %v304
    %356 = vmatprep.subr.mxu0 0.0
    %357 = vmatpush1.msra.mxu0 %v303
    %358 = vmatprep.subr.mxu0 0.0
    %359 = vmatpush2.msra.mxu0 0.0
    %360 = vmatprep.subr.mxu0 0.0
    %361 = vmatpush2.msra.mxu0 0.0
    %362 = vmatprep.subr.mxu0 0.0
    %363 = vmatpush2.msra.mxu0 0.0
    %364 = vmatprep.subr.mxu0 0.0
    %365 = vmatpush2.msra.mxu0 0.0
    %366 = vmatprep.subr.mxu0 0.0
    %367 = vmatpush2.msra.mxu0 0.0
    %368 = vmatprep.subr.mxu0 0.0
    %369 = vmatpush2.msra.mxu0 0.0
    %370 = vmatprep.subr.mxu0 0.0
    %371 = vmatpush2.msra.mxu0 0.0
    %372 = vmatprep.subr.mxu0 0.0
    %373 = vmatpush2.msra.mxu0 0.0
    %374 = vmatprep.subr.mxu0 0.0
    %375 = vmatpush2.msra.mxu0 0.0
    %376 = vmatprep.subr.mxu0 0.0
    %377 = vmatpush2.msra.mxu0 0.0
    %378 = vmatprep.subr.mxu0 0.0
    %379 = vmatpush2.msra.mxu0 0.0
    %380 = vmatprep.subr.mxu0 0.0
    %381 = vmatpush2.msra.mxu0 0.0
    %382 = vmatprep.subr.mxu0 0.0
    %383 = vmatpush2.msra.mxu0 0.0
    %384 = vmatprep.subr.mxu0 0.0
    %385 = vmatpush2.msra.mxu0 0.0
    %386 = vmatprep.subr.mxu0 0.0
    %387 = vmatpush2.msra.mxu0 0.0
    %388 = vmatprep.subr.mxu0 0.0
    %389 = vmatpush2.msra.mxu0 0.0
    %390 = vmatprep.mubr.f32.mxu0 0.0
    %391 = vmatmul.mubr.f32.gmra.mxu0 %v302
    %v392 = vpop.f32.mrf.mxu0
    %v393 = vadd.f32 %v324, %v392
    %v394 = vpop.f32.mrf.mxu0
    %395 = vdwg.mxu0
    %v396 = vld [vmem:[#allocation11] sm:$0xff]
    %v397 = vld [vmem:[#allocation11 + $0x8] sm:$0xff]
    %v398 = vld [vmem:[#allocation11 + $0x10] sm:$0xff]
    %v399 = vld [vmem:[#allocation11 + $0x18] sm:$0xff]
    %v400 = vld [vmem:[#allocation11 + $0x20] sm:$0xff]
    %v401 = vld [vmem:[#allocation11 + $0x28] sm:$0xff]
    %v402 = vld [vmem:[#allocation11 + $0x30] sm:$0xff]
    %v403 = vld [vmem:[#allocation11 + $0x38] sm:$0xff]
    %v404 = vld [vmem:[#allocation11 + $0x40] sm:$0xff]
    %v405 = vld [vmem:[#allocation11 + $0x48] sm:$0xff]
    %v406 = vld [vmem:[#allocation11 + $0x50] sm:$0xff]
    %v407 = vld [vmem:[#allocation11 + $0x58] sm:$0xff]
    %v408 = vld [vmem:[#allocation11 + $0x60] sm:$0xff]
    %v409 = vld [vmem:[#allocation11 + $0x68] sm:$0xff]
    %v410 = vld [vmem:[#allocation11 + $0x70] sm:$0xff]
    %v411 = vld [vmem:[#allocation11 + $0x78] sm:$0xff]
    %v412 = vld [vmem:[#allocation13] sm:$0x1]
    %v414 = vlaneseq
    %v415 = vshrl.u32 %v414, 7
    %v416 = vsub.s32 0, %v415
    %v417 = vrot.slane %v412, %v416
    %419 = vmatprep.subr.mxu0 0.0
    %420 = vmatpush1.msra.mxu0 %v411
    %421 = vmatprep.subr.mxu0 0.0
    %422 = vmatpush1.msra.mxu0 %v410
    %423 = vmatprep.subr.mxu0 0.0
    %424 = vmatpush1.msra.mxu0 %v409
    %425 = vmatprep.subr.mxu0 0.0
    %426 = vmatpush1.msra.mxu0 %v408
    %427 = vmatprep.subr.mxu0 0.0
    %428 = vmatpush1.msra.mxu0 %v407
    %429 = vmatprep.subr.mxu0 0.0
    %430 = vmatpush1.msra.mxu0 %v406
    %431 = vmatprep.subr.mxu0 0.0
    %432 = vmatpush1.msra.mxu0 %v405
    %433 = vmatprep.subr.mxu0 0.0
    %434 = vmatpush1.msra.mxu0 %v404
    %435 = vmatprep.subr.mxu0 0.0
    %436 = vmatpush1.msra.mxu0 %v403
    %437 = vmatprep.subr.mxu0 0.0
    %438 = vmatpush1.msra.mxu0 %v402
    %439 = vmatprep.subr.mxu0 0.0
    %440 = vmatpush1.msra.mxu0 %v401
    %441 = vmatprep.subr.mxu0 0.0
    %442 = vmatpush1.msra.mxu0 %v400
    %443 = vmatprep.subr.mxu0 0.0
    %444 = vmatpush1.msra.mxu0 %v399
    %445 = vmatprep.subr.mxu0 0.0
    %446 = vmatpush1.msra.mxu0 %v398
    %447 = vmatprep.subr.mxu0 0.0
    %448 = vmatpush1.msra.mxu0 %v397
    %449 = vmatprep.subr.mxu0 0.0
    %450 = vmatpush1.msra.mxu0 %v396
    %451 = vmatprep.subr.mxu0 0.0
    %452 = vmatpush2.msra.mxu0 0.0
    %453 = vmatprep.subr.mxu0 0.0
    %454 = vmatpush2.msra.mxu0 0.0
    %455 = vmatprep.subr.mxu0 0.0
    %456 = vmatpush2.msra.mxu0 0.0
    %457 = vmatprep.subr.mxu0 0.0
    %458 = vmatpush2.msra.mxu0 0.0
    %459 = vmatprep.subr.mxu0 0.0
    %460 = vmatpush2.msra.mxu0 0.0
    %461 = vmatprep.subr.mxu0 0.0
    %462 = vmatpush2.msra.mxu0 0.0
    %463 = vmatprep.subr.mxu0 0.0
    %464 = vmatpush2.msra.mxu0 0.0
    %465 = vmatprep.subr.mxu0 0.0
    %466 = vmatpush2.msra.mxu0 0.0
    %467 = vmatprep.subr.mxu0 0.0
    %468 = vmatpush2.msra.mxu0 0.0
    %469 = vmatprep.subr.mxu0 0.0
    %470 = vmatpush2.msra.mxu0 0.0
    %471 = vmatprep.subr.mxu0 0.0
    %472 = vmatpush2.msra.mxu0 0.0
    %473 = vmatprep.subr.mxu0 0.0
    %474 = vmatpush2.msra.mxu0 0.0
    %475 = vmatprep.subr.mxu0 0.0
    %476 = vmatpush2.msra.mxu0 0.0
    %477 = vmatprep.subr.mxu0 0.0
    %478 = vmatpush2.msra.mxu0 0.0
    %479 = vmatprep.subr.mxu0 0.0
    %480 = vmatpush2.msra.mxu0 0.0
    %481 = vmatprep.subr.mxu0 0.0
    %482 = vmatpush2.msra.mxu0 0.0
    %483 = vmatprep.mubr.f32.mxu0 0.0
    %484 = vmatmul.mubr.f32.gmra.mxu0 %v393
    %v485 = vpop.f32.mrf.mxu0
    %v486 = vadd.f32 %v417, %v485
    %v487 = vpop.f32.mrf.mxu0
    %488 = vdwg.mxu0
    %v489 = vld [vmem:[#allocation14] sm:$0xff]
    %v490 = vld [vmem:[#allocation14 + $0x8] sm:$0xff]
    %v491 = vld [vmem:[#allocation14 + $0x10] sm:$0xff]
    %v492 = vld [vmem:[#allocation14 + $0x18] sm:$0xff]
    %v493 = vld [vmem:[#allocation14 + $0x20] sm:$0xff]
    %v494 = vld [vmem:[#allocation14 + $0x28] sm:$0xff]
    %v495 = vld [vmem:[#allocation14 + $0x30] sm:$0xff]
    %v496 = vld [vmem:[#allocation14 + $0x38] sm:$0xff]
    %v497 = vld [vmem:[#allocation14 + $0x40] sm:$0xff]
    %v498 = vld [vmem:[#allocation14 + $0x48] sm:$0xff]
    %v499 = vld [vmem:[#allocation14 + $0x50] sm:$0xff]
    %v500 = vld [vmem:[#allocation14 + $0x58] sm:$0xff]
    %v501 = vld [vmem:[#allocation14 + $0x60] sm:$0xff]
    %v502 = vld [vmem:[#allocation14 + $0x68] sm:$0xff]
    %v503 = vld [vmem:[#allocation14 + $0x70] sm:$0xff]
    %v504 = vld [vmem:[#allocation14 + $0x78] sm:$0xff]
    %v505 = vld [vmem:[%s10] sm:$0x1]
    %v507 = vlaneseq
    %v508 = vshrl.u32 %v507, 7
    %v509 = vsub.s32 0, %v508
    %v510 = vrot.slane %v505, %v509
    %512 = vmatprep.subr.mxu0 0.0
    %513 = vmatpush1.msra.mxu0 %v504
    %514 = vmatprep.subr.mxu0 0.0
    %515 = vmatpush1.msra.mxu0 %v503
    %516 = vmatprep.subr.mxu0 0.0
    %517 = vmatpush1.msra.mxu0 %v502
    %518 = vmatprep.subr.mxu0 0.0
    %519 = vmatpush1.msra.mxu0 %v501
    %520 = vmatprep.subr.mxu0 0.0
    %521 = vmatpush1.msra.mxu0 %v500
    %522 = vmatprep.subr.mxu0 0.0
    %523 = vmatpush1.msra.mxu0 %v499
    %524 = vmatprep.subr.mxu0 0.0
    %525 = vmatpush1.msra.mxu0 %v498
    %526 = vmatprep.subr.mxu0 0.0
    %527 = vmatpush1.msra.mxu0 %v497
    %528 = vmatprep.subr.mxu0 0.0
    %529 = vmatpush1.msra.mxu0 %v496
    %530 = vmatprep.subr.mxu0 0.0
    %531 = vmatpush1.msra.mxu0 %v495
    %532 = vmatprep.subr.mxu0 0.0
    %533 = vmatpush1.msra.mxu0 %v494
    %534 = vmatprep.subr.mxu0 0.0
    %535 = vmatpush1.msra.mxu0 %v493
    %536 = vmatprep.subr.mxu0 0.0
    %537 = vmatpush1.msra.mxu0 %v492
    %538 = vmatprep.subr.mxu0 0.0
    %539 = vmatpush1.msra.mxu0 %v491
    %540 = vmatprep.subr.mxu0 0.0
    %541 = vmatpush1.msra.mxu0 %v490
    %542 = vmatprep.subr.mxu0 0.0
    %543 = vmatpush1.msra.mxu0 %v489
    %544 = vmatprep.subr.mxu0 0.0
    %545 = vmatpush2.msra.mxu0 0.0
    %546 = vmatprep.subr.mxu0 0.0
    %547 = vmatpush2.msra.mxu0 0.0
    %548 = vmatprep.subr.mxu0 0.0
    %549 = vmatpush2.msra.mxu0 0.0
    %550 = vmatprep.subr.mxu0 0.0
    %551 = vmatpush2.msra.mxu0 0.0
    %552 = vmatprep.subr.mxu0 0.0
    %553 = vmatpush2.msra.mxu0 0.0
    %554 = vmatprep.subr.mxu0 0.0
    %555 = vmatpush2.msra.mxu0 0.0
    %556 = vmatprep.subr.mxu0 0.0
    %557 = vmatpush2.msra.mxu0 0.0
    %558 = vmatprep.subr.mxu0 0.0
    %559 = vmatpush2.msra.mxu0 0.0
    %560 = vmatprep.subr.mxu0 0.0
    %561 = vmatpush2.msra.mxu0 0.0
    %562 = vmatprep.subr.mxu0 0.0
    %563 = vmatpush2.msra.mxu0 0.0
    %564 = vmatprep.subr.mxu0 0.0
    %565 = vmatpush2.msra.mxu0 0.0
    %566 = vmatprep.subr.mxu0 0.0
    %567 = vmatpush2.msra.mxu0 0.0
    %568 = vmatprep.subr.mxu0 0.0
    %569 = vmatpush2.msra.mxu0 0.0
    %570 = vmatprep.subr.mxu0 0.0
    %571 = vmatpush2.msra.mxu0 0.0
    %572 = vmatprep.subr.mxu0 0.0
    %573 = vmatpush2.msra.mxu0 0.0
    %574 = vmatprep.subr.mxu0 0.0
    %575 = vmatpush2.msra.mxu0 0.0
    %576 = vmatprep.mubr.f32.mxu0 0.0
    %577 = vmatmul.mubr.f32.gmra.mxu0 %v486
    %v578 = vpop.f32.mrf.mxu0
    %v579 = vadd.f32 %v510, %v578
    %v580 = vpop.f32.mrf.mxu0
    %581 = vdwg.mxu0
    %v582 = vmax.f32 %v579, 0.0
    %v583 = vld [vmem:[%s11] sm:$0xff]
    %v584 = vld [vmem:[%s11 + $0x8] sm:$0xff]
    %v585 = vld [vmem:[%s11 + $0x10] sm:$0xff]
    %v586 = vld [vmem:[%s11 + $0x18] sm:$0xff]
    %v587 = vld [vmem:[%s11 + $0x20] sm:$0xff]
    %v588 = vld [vmem:[%s11 + $0x28] sm:$0xff]
    %v589 = vld [vmem:[%s11 + $0x30] sm:$0xff]
    %v590 = vld [vmem:[%s11 + $0x38] sm:$0xff]
    %v591 = vld [vmem:[%s11 + $0x40] sm:$0xff]
    %v592 = vld [vmem:[%s11 + $0x48] sm:$0xff]
    %v593 = vld [vmem:[%s11 + $0x50] sm:$0xff]
    %v594 = vld [vmem:[%s11 + $0x58] sm:$0xff]
    %v595 = vld [vmem:[%s11 + $0x60] sm:$0xff]
    %v596 = vld [vmem:[%s11 + $0x68] sm:$0xff]
    %v597 = vld [vmem:[%s11 + $0x70] sm:$0xff]
    %v598 = vld [vmem:[%s11 + $0x78] sm:$0xff]
    %v599 = vld [vmem:[%s12] sm:$0x1]
    %v601 = vlaneseq
    %v602 = vshrl.u32 %v601, 7
    %v603 = vsub.s32 0, %v602
    %v604 = vrot.slane %v599, %v603
    %606 = vmatprep.subr.mxu0 0.0
    %607 = vmatpush1.msra.mxu0 %v598
    %608 = vmatprep.subr.mxu0 0.0
    %609 = vmatpush1.msra.mxu0 %v597
    %610 = vmatprep.subr.mxu0 0.0
    %611 = vmatpush1.msra.mxu0 %v596
    %612 = vmatprep.subr.mxu0 0.0
    %613 = vmatpush1.msra.mxu0 %v595
    %614 = vmatprep.subr.mxu0 0.0
    %615 = vmatpush1.msra.mxu0 %v594
    %616 = vmatprep.subr.mxu0 0.0
    %617 = vmatpush1.msra.mxu0 %v593
    %618 = vmatprep.subr.mxu0 0.0
    %619 = vmatpush1.msra.mxu0 %v592
    %620 = vmatprep.subr.mxu0 0.0
    %621 = vmatpush1.msra.mxu0 %v591
    %622 = vmatprep.subr.mxu0 0.0
    %623 = vmatpush1.msra.mxu0 %v590
    %624 = vmatprep.subr.mxu0 0.0
    %625 = vmatpush1.msra.mxu0 %v589
    %626 = vmatprep.subr.mxu0 0.0
    %627 = vmatpush1.msra.mxu0 %v588
    %628 = vmatprep.subr.mxu0 0.0
    %629 = vmatpush1.msra.mxu0 %v587
    %630 = vmatprep.subr.mxu0 0.0
    %631 = vmatpush1.msra.mxu0 %v586
    %632 = vmatprep.subr.mxu0 0.0
    %633 = vmatpush1.msra.mxu0 %v585
    %634 = vmatprep.subr.mxu0 0.0
    %635 = vmatpush1.msra.mxu0 %v584
    %636 = vmatprep.subr.mxu0 0.0
    %637 = vmatpush1.msra.mxu0 %v583
    %638 = vmatprep.subr.mxu0 0.0
    %639 = vmatpush2.msra.mxu0 0.0
    %640 = vmatprep.subr.mxu0 0.0
    %641 = vmatpush2.msra.mxu0 0.0
    %642 = vmatprep.subr.mxu0 0.0
    %643 = vmatpush2.msra.mxu0 0.0
    %644 = vmatprep.subr.mxu0 0.0
    %645 = vmatpush2.msra.mxu0 0.0
    %646 = vmatprep.subr.mxu0 0.0
    %647 = vmatpush2.msra.mxu0 0.0
    %648 = vmatprep.subr.mxu0 0.0
    %649 = vmatpush2.msra.mxu0 0.0
    %650 = vmatprep.subr.mxu0 0.0
    %651 = vmatpush2.msra.mxu0 0.0
    %652 = vmatprep.subr.mxu0 0.0
    %653 = vmatpush2.msra.mxu0 0.0
    %654 = vmatprep.subr.mxu0 0.0
    %655 = vmatpush2.msra.mxu0 0.0
    %656 = vmatprep.subr.mxu0 0.0
    %657 = vmatpush2.msra.mxu0 0.0
    %658 = vmatprep.subr.mxu0 0.0
    %659 = vmatpush2.msra.mxu0 0.0
    %660 = vmatprep.subr.mxu0 0.0
    %661 = vmatpush2.msra.mxu0 0.0
    %662 = vmatprep.subr.mxu0 0.0
    %663 = vmatpush2.msra.mxu0 0.0
    %664 = vmatprep.subr.mxu0 0.0
    %665 = vmatpush2.msra.mxu0 0.0
    %666 = vmatprep.subr.mxu0 0.0
    %667 = vmatpush2.msra.mxu0 0.0
    %668 = vmatprep.subr.mxu0 0.0
    %669 = vmatpush2.msra.mxu0 0.0
    %670 = vmatprep.mubr.f32.mxu0 0.0
    %671 = vmatmul.mubr.f32.gmra.mxu0 %v582
    %v672 = vpop.f32.mrf.mxu0
    %v673 = vadd.f32 %v604, %v672
    %v674 = vpop.f32.mrf.mxu0
    %675 = vdwg.mxu0
    %v676 = vand.u32 2147483647, %v673
    %677 = vst.msk [vmem:[#allocation16] sm:$0xff] %vm147, %v676
    // Predicated region
    $region86: #{tpu_custom_call.1} parent=1 // pred_check
      _
    $region87: #{tpu_custom_call.1} parent=1 // pred_check_branch
      %679 = sbr.rel (0) target = $region89
    $region88: #{tpu_custom_call.1} parent=1 // pred_region
      %s681 = ssub.s32 128, 128
      %682 = vsyncadd [#allocation4], %s681
      %s684 = sshll.u32 [#allocation16], 4
      %s685 = int_to_ptr.vmem [resolvable:$true] %s684
      %687 = dma.vmem_to_hbm [thread:$0]  %s685, 128, %s13, [#allocation4]
    $region89: #{tpu_custom_call.1} parent=1 // pred_fallthru
      _
    // Predicated region
    $region90: #{tpu_custom_call.1} parent=1 // pred_check
      _
    $region91: #{tpu_custom_call.1} parent=1 // pred_check_branch
      %689 = sbr.rel (0) target = $region93
    $region92: #{tpu_custom_call.1} parent=1 // pred_region
      %690 = dma.done [#allocation4], 128
    $region93: #{tpu_custom_call.1} parent=1 // pred_fallthru
      _
    %691 = vsyncpa [#allocation3], 1
    %692 = vsyncpa [#allocation6], 1
    %693 = vsyncpa [#allocation9], 1
    %694 = vsyncpa [#allocation12], 1
    %695 = vsyncpa [#allocation15], 1
    %696 = vsyncpa [#allocation4], 1

</llo_original>
